<compile_context>
chip_gen: v7x
topology: tpu7x:2x2x1
jax: 0.10.0
libtpu: 0.0.40
codegen_flags: <defaults>
</compile_context>

<pallas_src>
import functools

import jax
import jax.numpy as jnp
from jax.experimental import pallas as pl
from jax.experimental.pallas import tpu as pltpu


def _vflip_fused_kernel(img_ref, bbox_ref, img_out_ref, bbox_out_ref, *, height):
    """One (tm, W) image tile + the full (N, 4) bbox table.

    The H-block index of `img_ref` was already flipped by the input BlockSpec
    index_map; here we only reverse the rows *within* the tile (bulk op) and
    apply the y-coordinate remap to the bboxes.
    """
    x = img_ref[...]                      # (tm, W)
    tm = x.shape[0]

    # Within-tile sublane (row) reverse as an anti-identity permutation matmul.
    # Exact (0/1 coefficients), and the MXU is otherwise idle in this
    # memory-bound kernel, so it is effectively free.
    r = jax.lax.broadcasted_iota(jnp.int32, (tm, tm), 0)
    c = jax.lax.broadcasted_iota(jnp.int32, (tm, tm), 1)
    rev_perm = (r + c == tm - 1).astype(jnp.float32)
    rev = jnp.dot(rev_perm, x.astype(jnp.float32),
                  preferred_element_type=jnp.float32)
    img_out_ref[...] = rev.astype(img_out_ref.dtype)

    # Bbox update: cols 1 and 3 -> height - y + 1 (matches the PyTorch module;
    # note the resulting boxes keep the module's convention: no y1/y2 swap).
    b = bbox_ref[...]
    col = jax.lax.broadcasted_iota(jnp.int32, b.shape, 1)
    is_y = (col == 1) | (col == 3)
    bbox_out_ref[...] = jnp.where(is_y, jnp.float32(height) - b + 1.0, b)


def _choose_h_tile(H, W, itemsize, target_bytes=512 * 1024, max_rows=256):
    """Largest H-tile that (a) divides H, (b) is a multiple of 8, (c) keeps a
    (tm, W) block under ~target_bytes and <= max_rows.  Falls back to full H
    (always a legal block) when no such divisor exists or H already fits."""
    limit = min(max_rows, max(8, target_bytes // max(1, W * itemsize)))
    if H <= limit:
        return H
    for t in range(min(limit, H - 1), 7, -1):
        if H % t == 0 and t % 8 == 0:
            return t
    return H


def random_vertical_flip(img, bboxes, flag):
    """Apply the (possibly no-op) vertical flip.

    img:    (B, C, H, W) float32
    bboxes: (N, 4) float32 rows of (x1, y1, x2, y2)
    flag:   scalar bool / int — truthy means "flip", falsy means "identity"
    """
    B, C, H, W = img.shape
    BC = B * C
    tm = _choose_h_tile(H, W, jnp.dtype(img.dtype).itemsize)
    nhb = H // tm

    def flip_branch(img4, bb):
        img3 = img4.reshape(BC, H, W)          # free view: flip only touches H
        img_f, bbox_f = pl.pallas_call(
            functools.partial(_vflip_fused_kernel, height=H),
            grid=(BC, nhb),
            in_specs=[
                # Coarse flip handled by the DMA: output block h reads input
                # block (nhb - 1 - h).
                pl.BlockSpec((None, tm, W), lambda bc, h: (bc, nhb - 1 - h, 0)),
                # Full bbox table, resident across the grid.
                pl.BlockSpec(bboxes.shape, lambda bc, h: (0, 0)),
            ],
            out_specs=(
                pl.BlockSpec((None, tm, W), lambda bc, h: (bc, h, 0)),
                pl.BlockSpec(bboxes.shape, lambda bc, h: (0, 0)),
            ),
            out_shape=(
                jax.ShapeDtypeStruct((BC, H, W), img.dtype),
                jax.ShapeDtypeStruct(bboxes.shape, bboxes.dtype),
            ),
            compiler_params=pltpu.CompilerParams(
                dimension_semantics=("parallel", "arbitrary")),
        )(img3, bb)
        return img_f.reshape(B, C, H, W), bbox_f

    def identity_branch(img4, bb):
        return img4, bb

    return jax.lax.cond(flag != 0, flip_branch, identity_branch, img, bboxes)


if __name__ == "__main__":
    key = jax.random.PRNGKey(0)
    k_img, k_box, k_p = jax.random.split(key, 3)

    B, C, H, W = 2, 4, 16, 16
    N = 8
    p = 0.5

    img = jax.random.normal(k_img, (B, C, H, W), dtype=jnp.float32)
    bboxes = jax.random.uniform(
        k_box, (N, 4), dtype=jnp.float32, minval=1.0, maxval=float(H))

    # Random decision (deterministic given PRNGKey(0)); mirrors torch.rand(1) < p.
    flag = (jax.random.uniform(k_p, ()) < p)

    run = jax.jit(random_vertical_flip)
    img_out, bbox_out = run(img, bboxes, flag)
    img_out = jax.block_until_ready(img_out)
    bbox_out = jax.block_until_ready(bbox_out)

    # Pure-JAX reference for verification.
    if bool(flag):
        ref_img = jnp.flip(img, axis=2)
        ref_bbox = bboxes.at[:, 1].set(H - bboxes[:, 1] + 1.0)
        ref_bbox = ref_bbox.at[:, 3].set(H - bboxes[:, 3] + 1.0)
    else:
        ref_img = img
        ref_bbox = bboxes

    assert jnp.allclose(img_out, ref_img), "image flip mismatch"
    assert jnp.allclose(bbox_out, ref_bbox), "bbox transform mismatch"

    print("KERNEL_OK")
</pallas_src>

<mosaic_0001>
module attributes {stable_mosaic.version = 11 : i64} {
  func.func @_vflip_fused_kernel(%arg0: i32, %arg1: i32, %arg2: memref<1x16x16xf32, #tpu.memory_space<vmem>>, %arg3: memref<8x4xf32, #tpu.memory_space<vmem>>, %arg4: memref<1x16x16xf32, #tpu.memory_space<vmem>>, %arg5: memref<8x4xf32, #tpu.memory_space<vmem>>) attributes {dimension_semantics = [#tpu.dimension_semantics<parallel>, #tpu.dimension_semantics<arbitrary>], iteration_bounds = array<i64: 8, 1>, scalar_prefetch = 0 : i64, scratch_operands = 0 : i64, tpu.core_type = #tpu.core_type<tc>, window_params = [{transform_indices = @transform_0, window_bounds = array<i64: 1, 16, 16>}, {pipeline_mode = #tpu.pipeline_mode<synchronous>, transform_indices = @transform_1, window_bounds = array<i64: 8, 4>}, {transform_indices = @transform_2, window_bounds = array<i64: 1, 16, 16>}, {pipeline_mode = #tpu.pipeline_mode<synchronous>, transform_indices = @transform_3, window_bounds = array<i64: 8, 4>}]} {
    %c0 = arith.constant 0 : index
    %c0_0 = arith.constant 0 : index
    %c0_1 = arith.constant 0 : index
    %0 = vector.load %arg2[%c0, %c0_0, %c0_1] : memref<1x16x16xf32, #tpu.memory_space<vmem>>, vector<1x16x16xf32>
    %1 = vector.shape_cast %0 : vector<1x16x16xf32> to vector<16x16xf32>
    %2 = tpu.iota {dimensions = array<i32: 0>} : vector<16x16xi32>
    %3 = tpu.iota {dimensions = array<i32: 1>} : vector<16x16xi32>
    %4 = arith.addi %2, %3 : vector<16x16xi32>
    %c15_i32 = arith.constant 15 : i32
    %5 = vector.broadcast %c15_i32 : i32 to vector<16x16xi32>
    %6 = arith.cmpi eq, %4, %5 : vector<16x16xi32>
    %7 = arith.extui %6 : vector<16x16xi1> to vector<16x16xi32>
    %8 = arith.sitofp %7 : vector<16x16xi32> to vector<16x16xf32>
    %cst = arith.constant dense<0.000000e+00> : vector<16x16xf32>
    %9 = tpu.matmul %8, %1, %cst {dimension_numbers = #tpu.dot_dimension_numbers<[1], [0], [0], [1], [0, 0, 1, 1], [], []>} : vector<16x16xf32>, vector<16x16xf32>, vector<16x16xf32> -> vector<16x16xf32>
    %c0_2 = arith.constant 0 : index
    %c0_3 = arith.constant 0 : index
    %c0_4 = arith.constant 0 : index
    %10 = vector.load %arg4[%c0_2, %c0_3, %c0_4] : memref<1x16x16xf32, #tpu.memory_space<vmem>>, vector<1x16x16xf32>
    %11 = vector.shape_cast %10 : vector<1x16x16xf32> to vector<16x16xf32>
    %12 = vector.shape_cast %9 : vector<16x16xf32> to vector<1x16x16xf32>
    tpu.vector_store %arg4[%c0_2, %c0_3, %c0_4], %12 {strides = array<i32>} : memref<1x16x16xf32, #tpu.memory_space<vmem>>, vector<1x16x16xf32>,
    %c0_5 = arith.constant 0 : index
    %c0_6 = arith.constant 0 : index
    %13 = vector.load %arg3[%c0_5, %c0_6] : memref<8x4xf32, #tpu.memory_space<vmem>>, vector<8x4xf32>
    %14 = tpu.iota {dimensions = array<i32: 1>} : vector<8x4xi32>
    %c1_i32 = arith.constant 1 : i32
    %15 = vector.broadcast %c1_i32 : i32 to vector<8x4xi32>
    %16 = arith.cmpi eq, %14, %15 : vector<8x4xi32>
    %c3_i32 = arith.constant 3 : i32
    %17 = vector.broadcast %c3_i32 : i32 to vector<8x4xi32>
    %18 = arith.cmpi eq, %14, %17 : vector<8x4xi32>
    %19 = arith.ori %16, %18 : vector<8x4xi1>
    %cst_7 = arith.constant 1.600000e+01 : f32
    %20 = vector.broadcast %cst_7 : f32 to vector<8x4xf32>
    %21 = arith.subf %20, %13 : vector<8x4xf32>
    %cst_8 = arith.constant 1.000000e+00 : f32
    %22 = vector.broadcast %cst_8 : f32 to vector<8x4xf32>
    %23 = arith.addf %21, %22 : vector<8x4xf32>
    %24 = arith.select %19, %23, %13 : vector<8x4xi1>, vector<8x4xf32>
    %c0_9 = arith.constant 0 : index
    %c0_10 = arith.constant 0 : index
    %25 = vector.load %arg5[%c0_9, %c0_10] : memref<8x4xf32, #tpu.memory_space<vmem>>, vector<8x4xf32>
    tpu.vector_store %arg5[%c0_9, %c0_10], %24 {strides = array<i32>} : memref<8x4xf32, #tpu.memory_space<vmem>>, vector<8x4xf32>,
    return
  }
  func.func @transform_0(%arg0: i32, %arg1: i32) -> (i32, i32, i32) {
    %c0_i32 = arith.constant 0 : i32
    %0 = arith.subi %c0_i32, %arg1 : i32
    %c0_i32_0 = arith.constant 0 : i32
    %c0_i32_1 = arith.constant 0 : i32
    return %arg0, %0, %c0_i32_0 : i32, i32, i32
  }
  func.func @transform_1(%arg0: i32, %arg1: i32) -> (i32, i32) {
    %c0_i32 = arith.constant 0 : i32
    %c0_i32_0 = arith.constant 0 : i32
    %c0_i32_1 = arith.constant 0 : i32
    return %c0_i32, %c0_i32_0 : i32, i32
  }
  func.func @transform_2(%arg0: i32, %arg1: i32) -> (i32, i32, i32) {
    %c0_i32 = arith.constant 0 : i32
    %c0_i32_0 = arith.constant 0 : i32
    return %arg0, %arg1, %c0_i32 : i32, i32, i32
  }
  func.func @transform_3(%arg0: i32, %arg1: i32) -> (i32, i32) {
    %c0_i32 = arith.constant 0 : i32
    %c0_i32_0 = arith.constant 0 : i32
    %c0_i32_1 = arith.constant 0 : i32
    return %c0_i32, %c0_i32_0 : i32, i32
  }
}

</mosaic_0001>

<llo_original>
// kernel: branch_1_fun.1
$region0: #{branch_1_fun.1}
  #allocation0 [shape = 'u32[]', space=smem, size = 0x4, offset = 0x4, fixed_abs, tag = 'smem constant byte address 0x4 - core index']
  #allocation1 [shape = 'u32[144,128]{1,0:T(1,128)}', space=vmem, size = 0x12000, scoped, tag = 'internal scratch']
  %s0 = inlined_call_operand.vmem [shape: f32[8,16,16], index: 0, kind: input, shape index: {}]
  %s1 = inlined_call_operand.vmem [shape: f32[8,4], index: 1, kind: input, shape index: {}]
  %s2 = inlined_call_operand.hbm [shape: f32[8,16,16], index: 2, kind: output, shape index: {0}]
  %s3 = inlined_call_operand.vmem [shape: f32[8,4], index: 3, kind: output, shape index: {1}]
  %4 = xla_tuple %s2, %s3
  %s5 = sld [smem:[#allocation0]]
  $region49: #{branch_1_fun.1} parent=0
    _
  %s7 = ssub.s32 1, %s5
  %s8 = scalar_select 0, %s7, %s5
  $region1: #{branch_1_fun.1} parent=0
    #allocation2 [shape = 'u8[16384]{0}', space=vmem, size = 0x4000, scoped, tag = 'output window, operand 0']
    #allocation3 [shape = 's32[2]{0}', space=sflag, size = 0x8, scoped, tag = 'scoped memory for branch_1_fun.1']
    %9 = vsyncpa [#allocation3], 0
    %s10 = scalar_lea.sflag [#allocation3], 1
    %11 = vsyncpa %s10, 0
    loop: start=0, step=1, limit=10
    $region2: #{branch_1_fun.1} parent=1 // loop_pre_header
      _
    $region3: #{branch_1_fun.1} parent=1 // loop_header
      %s13 = sphi 0, %s17
      %p14 = scmp.ge.s32.totalorder %s13, 10
      %s20 = sphi 0, %s32
      %s21 = sphi 0, %s28
      %s22 = sphi 0, %s20
      %s23 = sphi 0, %s21
      %s24 = sphi 0, %s22
      %s25 = sphi 0, %s23
      %s39 = sphi 0, %s41
      %s42 = sphi 0, %s39
      %s43 = sphi 0, %s42
      %s59 = sphi 0, %s43
      %s63 = sphi 0, %s63
      %s65 = sphi 0, %s63
      %s66 = sphi 0, %s65
      %s80 = sphi 0, %s66
      %s88 = sphi 0, %s90
      %s91 = sphi 0, %s88
      %s92 = sphi 0, %s91
      %s108 = sphi 0, %s92
      %s112 = sphi 0, %s112
      %s114 = sphi 0, %s112
      %s115 = sphi 0, %s114
      %s129 = sphi 0, %s115
    $region4: #{branch_1_fun.1} parent=1 // loop_header_branch
      %16 = sbr.rel (%p14) target = $region8
    $region5: #{branch_1_fun.1} parent=1 // loop_body
      %s18 = ssub.s32 %s13, 1
      %s19 = ssub.s32 %s13, 2
      %s26 = sadd.s32 1, %s21
      %p27 = scmp.ge.s32.totalorder %s26, 1
      %s28 = scalar_select %p27, 0, %s26
      %s29 = sadd.s32 1, %s20
      %s30 = scalar_select %p27, %s29, %s20
      %p31 = scmp.ge.s32.totalorder %s30, 8
      %s32 = scalar_select %p31, 0, %s30
      %s33 = ssub.s32 0, %s21
      %s34 = ssub.s32 0, %s28
      %s35 = ssub.s32 %s20, %s32
      %s36 = ssub.s32 %s33, %s34
      %s37 = sor.u32 %s35, %s36
      %p38 = scmp.eq.s32.totalorder %s37, 0
      %s40 = sadd.s32 %s39, 1
      %s41 = scalar_select %p38, %s39, %s40
      %p44 = pneg %p38
      %p45 = scmp.eq.s32.totalorder %s13, 7
      %p46 = por %p44, %p45
      %p47 = scmp.ne.s32.totalorder %s39, %s42
      %p48 = scmp.eq.s32.totalorder %s13, 0
      %p49 = por %p47, %p48
      %p50 = scmp.ne.s32.totalorder %s39, %s42
      %p51 = scmp.eq.s32.totalorder %s18, 7
      %p52 = por %p50, %p51
      %p53 = scmp.ne.s32.totalorder %s42, %s43
      %p54 = scmp.eq.s32.totalorder %s18, 0
      %p55 = por %p53, %p54
      %p56 = scmp.ne.s32.totalorder %s42, %s43
      %p57 = scmp.eq.s32.totalorder %s19, 7
      %p58 = por %p56, %p57
      %p60 = scmp.ne.s32.totalorder %s43, %s59
      %p61 = scmp.eq.s32.totalorder %s19, 0
      %p62 = por %p60, %p61
      %s64 = sadd.s32 %s63, 1
      %p67 = scmp.eq.s32.totalorder %s13, 7
      %p68 = scmp.ne.s32.totalorder %s63, %s65
      %p69 = scmp.eq.s32.totalorder %s13, 0
      %p70 = por %p68, %p69
      %p71 = scmp.ne.s32.totalorder %s63, %s65
      %p72 = scmp.eq.s32.totalorder %s18, 7
      %p73 = por %p71, %p72
      %p74 = scmp.ne.s32.totalorder %s65, %s66
      %p75 = scmp.eq.s32.totalorder %s18, 0
      %p76 = por %p74, %p75
      %p77 = scmp.ne.s32.totalorder %s65, %s66
      %p78 = scmp.eq.s32.totalorder %s19, 7
      %p79 = por %p77, %p78
      %p81 = scmp.ne.s32.totalorder %s66, %s80
      %p82 = scmp.eq.s32.totalorder %s19, 0
      %p83 = por %p81, %p82
      %s84 = ssub.s32 %s20, %s32
      %s85 = ssub.s32 %s21, %s28
      %s86 = sor.u32 %s84, %s85
      %p87 = scmp.eq.s32.totalorder %s86, 0
      %s89 = sadd.s32 %s88, 1
      %s90 = scalar_select %p87, %s88, %s89
      %p93 = pneg %p87
      %p94 = scmp.eq.s32.totalorder %s13, 7
      %p95 = por %p93, %p94
      %p96 = scmp.ne.s32.totalorder %s88, %s91
      %p97 = scmp.eq.s32.totalorder %s13, 0
      %p98 = por %p96, %p97
      %p99 = scmp.ne.s32.totalorder %s88, %s91
      %p100 = scmp.eq.s32.totalorder %s18, 7
      %p101 = por %p99, %p100
      %p102 = scmp.ne.s32.totalorder %s91, %s92
      %p103 = scmp.eq.s32.totalorder %s18, 0
      %p104 = por %p102, %p103
      %p105 = scmp.ne.s32.totalorder %s91, %s92
      %p106 = scmp.eq.s32.totalorder %s19, 7
      %p107 = por %p105, %p106
      %p109 = scmp.ne.s32.totalorder %s92, %s108
      %p110 = scmp.eq.s32.totalorder %s19, 0
      %p111 = por %p109, %p110
      %s113 = sadd.s32 %s112, 1
      %p116 = scmp.eq.s32.totalorder %s13, 7
      %p117 = scmp.ne.s32.totalorder %s112, %s114
      %p118 = scmp.eq.s32.totalorder %s13, 0
      %p119 = por %p117, %p118
      %p120 = scmp.ne.s32.totalorder %s112, %s114
      %p121 = scmp.eq.s32.totalorder %s18, 7
      %p122 = por %p120, %p121
      %p123 = scmp.ne.s32.totalorder %s114, %s115
      %p124 = scmp.eq.s32.totalorder %s18, 0
      %p125 = por %p123, %p124
      %p126 = scmp.ne.s32.totalorder %s114, %s115
      %p127 = scmp.eq.s32.totalorder %s19, 7
      %p128 = por %p126, %p127
      %p130 = scmp.ne.s32.totalorder %s115, %s129
      %p131 = scmp.eq.s32.totalorder %s19, 0
      %p132 = por %p130, %p131
      %p133 = scmp.le.s32.totalorder 1, %s13
      %p134 = scmp.lt.s32.totalorder %s13, 9
      %p135 = pnand %p133, %p134
      %p136 = pneg %p135
      // Predicated region
      $region9: #{branch_1_fun.1} parent=5 // pred_check
        _
      $region10: #{branch_1_fun.1} parent=5 // pred_check_branch
        %138 = sbr.rel (%p135) target = $region12
      $region11: #{branch_1_fun.1} parent=5 // pred_region
        %s139 = ssub.s32 %s13, 1
        // Predicated region
        $region13: #{branch_1_fun.1} parent=11 // pred_check
          %p140 = pneg %p76
        $region14: #{branch_1_fun.1} parent=11 // pred_check_branch
          %142 = sbr.rel (%p140) target = $region16
        $region15: #{branch_1_fun.1} parent=11 // pred_region
          _
        $region16: #{branch_1_fun.1} parent=11 // pred_fallthru
          _
      $region12: #{branch_1_fun.1} parent=5 // pred_fallthru
        _
      %p143 = scmp.lt.s32.totalorder %s13, 8
      // Predicated region
      $region17: #{branch_1_fun.1} parent=5 // pred_check
        %p144 = pneg %p143
      $region18: #{branch_1_fun.1} parent=5 // pred_check_branch
        %146 = sbr.rel (%p144) target = $region20
      $region19: #{branch_1_fun.1} parent=5 // pred_region
        // Predicated region
        $region21: #{branch_1_fun.1} parent=19 // pred_check
          %p147 = pneg %p49
        $region22: #{branch_1_fun.1} parent=19 // pred_check_branch
          %149 = sbr.rel (%p147) target = $region24
        $region23: #{branch_1_fun.1} parent=19 // pred_region
          %s150 = ssub.s32 0, %s21
          %s151 = smul.u32 2, %s150
          %p152 = scmp.lt.s32.totalorder %s20, 7
          %s153 = scalar_select %p152, %s20, 7
          %p154 = scmp.lt.s32.totalorder %s151, 1
          %s155 = scalar_select %p154, %s151, 1
          %s156 = smul.addr %s153, 2
          %s157 = sadd.s32 %s155, %s156
          %s158 = smul.addr %s157, 8
          %s159 = scalar_lea.vmem %s0, %s158
          %s160 = ssub.s32 0, %s21
          %s161 = smul.u32 2, %s160
        $region24: #{branch_1_fun.1} parent=19 // pred_fallthru
          _
      $region20: #{branch_1_fun.1} parent=5 // pred_fallthru
        _
      %p162 = scmp.le.s32.totalorder 1, %s13
      %p163 = scmp.lt.s32.totalorder %s13, 9
      %p164 = pnand %p162, %p163
      %p165 = pneg %p164
      // Predicated region
      $region25: #{branch_1_fun.1} parent=5 // pred_check
        _
      $region26: #{branch_1_fun.1} parent=5 // pred_check_branch
        %167 = sbr.rel (%p164) target = $region28
      $region27: #{branch_1_fun.1} parent=5 // pred_region
        %s168 = ssub.s32 %s13, 1
        %s169 = ssub.s32 0, %s23
        %s170 = smul.u32 2, %s169
        %p171 = scmp.lt.s32.totalorder %s22, 7
        %s172 = scalar_select %p171, %s22, 7
        %p173 = scmp.lt.s32.totalorder %s170, 1
        %s174 = scalar_select %p173, %s170, 1
        %s175 = smul.addr %s172, 2
        %s176 = sadd.s32 %s174, %s175
        %s177 = smul.addr %s176, 8
        %s178 = scalar_lea.vmem %s0, %s177
        %p179 = pneg %p55
        %p180 = pneg %p52
        %p181 = pneg %p76
        %p182 = pneg %p73
        %p183 = pneg %p104
        %p184 = pneg %p101
        %s185 = sand.u32 %s91, 1
        %s186 = scalar_lea.sflag [#allocation3], %s185
        %s187 = sand.u32 %s91, 1
        %s188 = smul.addr %s187, 16
        %s189 = scalar_lea.vmem [#allocation2], %s188
        %p190 = pneg %p125
        %p191 = pneg %p122
        %s192 = ssub.s32 0, %s23
        %s193 = smul.u32 2, %s192
        %p194 = scmp.lt.s32.totalorder %s22, 7
        %s195 = scalar_select %p194, %s22, 7
        %p196 = scmp.lt.s32.totalorder %s193, 1
        %s197 = scalar_select %p196, %s193, 1
        %s198 = smul.addr %s195, 2
        %s199 = sadd.s32 %s197, %s198
        %s200 = smul.addr %s199, 8
        %s201 = scalar_lea.vmem %s0, %s200
        %s202 = ssub.s32 0, %s23
        %s203 = smul.u32 2, %s202
        %s204 = smul.u32 2, %s23
        %v205 = vld [vmem:[%s201] sm:$0xff]
        %v206 = vld [vmem:[%s201 + $0x8] sm:$0xff]
        %v207 = vlaneseq
        %v208 = vshrl.u32 %v207, 7
        %v209 = vadd.s32 %v208, 8
        %v210 = vlaneseq
        %v211 = vand.u32 %v210, 127
        %v212 = vadd.s32 %v208, %v211
        %v213 = vadd.s32 %v209, %v211
        %vm214 = vcmp.eq.s32.totalorder %v212, 15
        %vm215 = vcmp.eq.s32.totalorder %v213, 15
        %v216 = vsel %vm214, 1, 0
        %v217 = vsel %vm215, 1, 0
        %v218 = vcvt.s32.f32 %v216
        %v219 = vcvt.s32.f32 %v217
        %vm220 = vcmask 130048
        %v222 = vsel %vm220, %v218, 0
        %v225 = vsel %vm220, %v219, 0
        %227 = vmatprep.subr.mxu0 0.0
        %228 = vmatpush1.msra.mxu0 %v205
        %229 = vmatprep.subr.mxu0 0.0
        %230 = vmatpush1.msra.mxu0 %v206
        %231 = vmatprep.subr.mxu0 0.0
        %232 = vmatpush1.msra.mxu0 0.0
        %233 = vmatprep.subr.mxu0 0.0
        %234 = vmatpush1.msra.mxu0 0.0
        %235 = vmatprep.subr.mxu0 0.0
        %236 = vmatpush1.msra.mxu0 0.0
        %237 = vmatprep.subr.mxu0 0.0
        %238 = vmatpush1.msra.mxu0 0.0
        %239 = vmatprep.subr.mxu0 0.0
        %240 = vmatpush1.msra.mxu0 0.0
        %241 = vmatprep.subr.mxu0 0.0
        %242 = vmatpush1.msra.mxu0 0.0
        %243 = vmatprep.subr.mxu0 0.0
        %244 = vmatpush1.msra.mxu0 0.0
        %245 = vmatprep.subr.mxu0 0.0
        %246 = vmatpush1.msra.mxu0 0.0
        %247 = vmatprep.subr.mxu0 0.0
        %248 = vmatpush1.msra.mxu0 0.0
        %249 = vmatprep.subr.mxu0 0.0
        %250 = vmatpush1.msra.mxu0 0.0
        %251 = vmatprep.subr.mxu0 0.0
        %252 = vmatpush1.msra.mxu0 0.0
        %253 = vmatprep.subr.mxu0 0.0
        %254 = vmatpush1.msra.mxu0 0.0
        %255 = vmatprep.subr.mxu0 0.0
        %256 = vmatpush1.msra.mxu0 0.0
        %257 = vmatprep.subr.mxu0 0.0
        %258 = vmatpush1.msra.mxu0 0.0
        %259 = vmatprep.subr.mxu0 0.0
        %260 = vmatpush1.msra.mxu0 0.0
        %261 = vmatprep.subr.mxu0 0.0
        %262 = vmatpush1.msra.mxu0 0.0
        %263 = vmatprep.subr.mxu0 0.0
        %264 = vmatpush1.msra.mxu0 0.0
        %265 = vmatprep.subr.mxu0 0.0
        %266 = vmatpush1.msra.mxu0 0.0
        %267 = vmatprep.subr.mxu0 0.0
        %268 = vmatpush1.msra.mxu0 0.0
        %269 = vmatprep.subr.mxu0 0.0
        %270 = vmatpush1.msra.mxu0 0.0
        %271 = vmatprep.subr.mxu0 0.0
        %272 = vmatpush1.msra.mxu0 0.0
        %273 = vmatprep.subr.mxu0 0.0
        %274 = vmatpush1.msra.mxu0 0.0
        %275 = vmatprep.subr.mxu0 0.0
        %276 = vmatpush1.msra.mxu0 0.0
        %277 = vmatprep.subr.mxu0 0.0
        %278 = vmatpush1.msra.mxu0 0.0
        %279 = vmatprep.subr.mxu0 0.0
        %280 = vmatpush1.msra.mxu0 0.0
        %281 = vmatprep.subr.mxu0 0.0
        %282 = vmatpush1.msra.mxu0 0.0
        %283 = vmatprep.subr.mxu0 0.0
        %284 = vmatpush1.msra.mxu0 0.0
        %285 = vmatprep.subr.mxu0 0.0
        %286 = vmatpush1.msra.mxu0 0.0
        %287 = vmatprep.subr.mxu0 0.0
        %288 = vmatpush1.msra.mxu0 0.0
        %289 = vmatprep.subr.mxu0 0.0
        %290 = vmatpush1.msra.mxu0 0.0
        %291 = vmatprep.mubr.f32.mxu0 0.0
        %292 = vmatmul.mubr.f32.gmra.mrb[0].mxu0 %v222
        %v293 = vpop.f32.mrb[0].mxu0
        %v294 = vadd.f32 0.0, %v293
        %v295 = vpop.f32.mrb[0].mxu0
        %296 = vmatprep.mubr.f32.mxu0 0.0
        %297 = vmatmul.mubr.f32.gmra.mrb[0].mxu0 %v225
        %v298 = vpop.f32.mrb[0].mxu0
        %v299 = vadd.f32 0.0, %v298
        %v300 = vpop.f32.mrb[0].mxu0
        %301 = vdwg.mxu0
        %302 = vst.msk [vmem:[%s189] sm:$0xff] %vm220, %v294
        %303 = vst.msk [vmem:[%s189 + $0x8] sm:$0xff] %vm220, %v299
        %v304 = vld [vmem:[%s1] sm:$0xff]
        %vm305 = vcmp.eq.s32.totalorder %v211, 1
        %vm306 = vcmp.eq.s32.totalorder %v211, 3
        %vm307 = vmor %vm305, %vm306
        %v308 = vsub.f32 16.0, %v304
        %v309 = vadd.f32 %v308, 1.0
        %v310 = vsel %vm307, %v309, %v304
        %vm311 = vcmask 31744
        %312 = vst.msk [vmem:[%s3] sm:$0xff] %vm311, %v310
        %s313 = sand.u32 %s91, 1
        %s314 = scalar_lea.sflag [#allocation3], %s313
        %s315 = sand.u32 %s91, 1
        %s316 = smul.addr %s315, 16
        %s317 = scalar_lea.vmem [#allocation2], %s316
        // Predicated region
        $region29: #{branch_1_fun.1} parent=27 // pred_check
          %p318 = pneg %p101
        $region30: #{branch_1_fun.1} parent=27 // pred_check_branch
          %320 = sbr.rel (%p318) target = $region32
        $region31: #{branch_1_fun.1} parent=27 // pred_region
          %s321 = smul.u32 2, %s23
          %s323 = ssub.s32 256, 256
          %324 = vsyncadd %s314, %s323
          %s325 = smul.addr %s22, 2
          %s326 = sadd.s32 %s321, %s325
          %s327 = smul.addr %s326, 128
          %s328 = scalar_lea.hbm %s2, %s327
          %s329 = sshll.u32 %s317, 4
          %s330 = int_to_ptr.vmem [resolvable:$true] %s329
          %335 = dma.vmem_to_hbm [thread:$0]  %s330, 256, %s328, %s314, 128, 128, 8
        $region32: #{branch_1_fun.1} parent=27 // pred_fallthru
          _
        // Predicated region
        $region33: #{branch_1_fun.1} parent=27 // pred_check
          %p336 = pneg %p122
        $region34: #{branch_1_fun.1} parent=27 // pred_check_branch
          %338 = sbr.rel (%p336) target = $region36
        $region35: #{branch_1_fun.1} parent=27 // pred_region
          _
        $region36: #{branch_1_fun.1} parent=27 // pred_fallthru
          _
        // Predicated region
        $region37: #{branch_1_fun.1} parent=27 // pred_check
          %p339 = pneg %p122
        $region38: #{branch_1_fun.1} parent=27 // pred_check_branch
          %341 = sbr.rel (%p339) target = $region40
        $region39: #{branch_1_fun.1} parent=27 // pred_region
          _
        $region40: #{branch_1_fun.1} parent=27 // pred_fallthru
          _
      $region28: #{branch_1_fun.1} parent=5 // pred_fallthru
        _
      %p342 = scmp.le.s32.totalorder 2, %s13
      // Predicated region
      $region41: #{branch_1_fun.1} parent=5 // pred_check
        %p343 = pneg %p342
      $region42: #{branch_1_fun.1} parent=5 // pred_check_branch
        %345 = sbr.rel (%p343) target = $region44
      $region43: #{branch_1_fun.1} parent=5 // pred_region
        %s346 = ssub.s32 %s13, 2
        // Predicated region
        $region45: #{branch_1_fun.1} parent=43 // pred_check
          %p347 = pneg %p107
        $region46: #{branch_1_fun.1} parent=43 // pred_check_branch
          %349 = sbr.rel (%p347) target = $region48
        $region47: #{branch_1_fun.1} parent=43 // pred_region
          %s350 = sand.u32 %s92, 1
          %s351 = scalar_lea.sflag [#allocation3], %s350
          %s352 = sand.u32 %s92, 1
          %s353 = smul.addr %s352, 16
          %s354 = scalar_lea.vmem [#allocation2], %s353
          %355 = dma.done %s351, 256
        $region48: #{branch_1_fun.1} parent=43 // pred_fallthru
          _
      $region44: #{branch_1_fun.1} parent=5 // pred_fallthru
        _
    $region6: #{branch_1_fun.1} parent=1 // loop_footer
      %s17 = sadd.s32 1, %s13
    $region7: #{branch_1_fun.1} parent=1 // loop_footer_branch
      %12 = sbr.rel target = $region3
    $region8: #{branch_1_fun.1} parent=1 // loop_exit
      _
    %356 = vsyncpa [#allocation3], 1
    %s357 = scalar_lea.sflag [#allocation3], 1
    %358 = vsyncpa %s357, 1

</llo_original>
